<compile_context>
chip_gen: v6e
topology: v6e:2x2x1
jax: 0.10.0
libtpu: 0.0.40
codegen_flags: <defaults>
</compile_context>

<pallas_src>
import functools

import jax
import jax.numpy as jnp
from jax.experimental import pallas as pl
from jax.experimental.pallas import tpu as pltpu


def _round_up(a, b):
    return ((a + b - 1) // b) * b


def _vmem_capacity_bytes():
    try:
        return int(pltpu.get_tpu_info().vmem_capacity_bytes)
    except Exception:
        return 64 * 1024 * 1024          # conservative fallback (v7x per-TC VMEM)


def _default_num_splits():
    # 2 TensorCores per chip only on v7x; v5e/v6e are single-TC.
    try:
        kind = jax.devices()[0].device_kind.lower()
    except Exception:
        return 1
    return 2 if "v7" in kind else 1


def _pick_tile_n(n_nodes, hidden, itemsize, vmem_cap):
    """Node-tile length: ~4 MiB of VMEM per tile per input, capped by VMEM."""
    lane_h = _round_up(max(hidden, 1), 128)          # VMEM lane padding
    bytes_per_row = lane_h * itemsize
    target = (4 * 1024 * 1024) // bytes_per_row
    input_budget = int(vmem_cap * 0.4)               # z + x, double-buffered
    cap = input_budget // (2 * 2 * bytes_per_row)
    tn = min(target, cap)
    tn = max(128, (tn // 128) * 128)                 # lane-aligned batch-id row
    tn = min(tn, _round_up(max(n_nodes, 1), 128))
    return int(tn)


def _decoder_kernel(batch_ref, z_ref, x_ref, wz_ref, wx_ref, b_ref,
                    out_ref, acc_z_ref, acc_x_ref,
                    *, n_nodes, tile_n, tiles_per_core):
    # batch_ref: (1, TN) int32 graph ids (padding columns are -1)
    # z_ref/x_ref: (TN, H) node-feature tiles (native dtypes)
    # wz_ref/wx_ref: (H, H) f32 = weight.T[:H] / weight.T[H:]
    # b_ref: (1, H) f32
    # out_ref: (Bp, H)  per-split partial output slab (split axis squeezed)
    # acc_z_ref/acc_x_ref: (Bp, H) f32 VMEM accumulators
    c = pl.program_id(0)                 # split index (CORE_PARALLEL on v7x)
    t = pl.program_id(1)                 # node-tile index ("arbitrary" reduction)
    nt = pl.num_programs(1)

    @pl.when(t == 0)
    def _init():
        acc_z_ref[...] = jnp.zeros_like(acc_z_ref)
        acc_x_ref[...] = jnp.zeros_like(acc_x_ref)

    bp = acc_z_ref.shape[0]
    tn = batch_ref.shape[1]

    # Row-validity mask for the ragged last tile: OOB rows may hold garbage
    # (incl. NaN) and 0 * NaN = NaN, so features must be zeroed explicitly.
    start = (c * tiles_per_core + t) * tile_n
    row = jax.lax.broadcasted_iota(jnp.int32, (tn, 1), 0) + start
    valid = row < n_nodes                                         # (TN, 1)

    batch = batch_ref[...]                                        # (1, TN)
    seg = jax.lax.broadcasted_iota(jnp.int32, (bp, tn), 0)        # (Bp, TN)
    onehot = seg == batch                                         # (Bp, TN) bool

    z = jnp.where(valid, z_ref[...], 0)                           # (TN, H)
    x = jnp.where(valid, x_ref[...], 0)                           # (TN, H)

    # Fused segment-sums: two MXU passes, f32 accumulation, no concat temp.
    acc_z_ref[...] += jnp.dot(onehot.astype(z.dtype), z,
                              preferred_element_type=jnp.float32)
    acc_x_ref[...] += jnp.dot(onehot.astype(x.dtype), x,
                              preferred_element_type=jnp.float32)

    @pl.when(t == nt - 1)
    def _finalize():
        out = jnp.dot(acc_z_ref[...], wz_ref[...],
                      preferred_element_type=jnp.float32)
        out += jnp.dot(acc_x_ref[...], wx_ref[...],
                       preferred_element_type=jnp.float32)
        # Bias only on split 0; partial slabs are summed in the wrapper.
        bias_scale = (c == 0).astype(jnp.float32)
        out = out + bias_scale * b_ref[...]
        out_ref[...] = out.astype(out_ref.dtype)


def decoder_forward(x, z, batch, weight, bias, num_graphs,
                    *, tile_n=None, num_splits=None):
    """x, z: (N, H); batch: (N,) int; weight: (H, 2H) torch layout; bias: (H,)."""
    N, H = z.shape
    assert x.shape == (N, H)
    B = int(num_graphs)

    isz_z = jnp.dtype(z.dtype).itemsize
    isz_x = jnp.dtype(x.dtype).itemsize
    max_isz = max(isz_z, isz_x)

    if num_splits is None:
        num_splits = _default_num_splits()
    num_splits = max(1, int(num_splits))

    vmem_cap = _vmem_capacity_bytes()

    Bp = _round_up(max(B, 8), 8)                        # sublane-aligned rows
    if tile_n is None:
        TN = _pick_tile_n(N, H, max_isz, vmem_cap)
    else:
        TN = _round_up(max(int(tile_n), 128), 128)
        TN = min(TN, _round_up(max(N, 128), 128))

    tiles_total = pl.cdiv(N, TN)
    tiles_per_core = pl.cdiv(tiles_total, num_splits)
    tpc = tiles_per_core
    Np = num_splits * tpc * TN
    last_blk = tiles_total - 1

    # Only the tiny batch-id vector is padded (to -1); z/x stay untouched in HBM.
    batch_p = jnp.pad(jnp.asarray(batch, jnp.int32), (0, Np - N),
                      constant_values=-1).reshape(1, Np)

    # Weight: torch (H, 2H) -> pre-split rows of weight.T (no in-kernel slicing).
    w_t = weight.astype(jnp.float32).T                  # (2H, H)
    wz = w_t[:H]                                        # multiplies z_sum
    wx = w_t[H:]                                        # multiplies x_sum
    b_p = bias.astype(jnp.float32).reshape(1, H)

    # ---- VMEM footprint (lane/sublane padded) and per-chip limit ----
    Hl = _round_up(H, 128)
    Hs = _round_up(H, 8)
    footprint = (
        2 * TN * Hl * isz_z              # z tiles, double-buffered
        + 2 * TN * Hl * isz_x            # x tiles, double-buffered
        + 2 * 8 * TN * 4                 # batch-id tiles
        + 2 * 2 * Hs * Hl * 4            # W_z, W_x
        + 2 * 8 * Hl * 4                 # bias
        + 2 * Bp * Hl * 4                # output slab
        + 2 * Bp * Hl * 4                # acc_z + acc_x scratch
        + Bp * TN * 4                    # one-hot temp
        + TN * Hl * (isz_z + isz_x)      # masked z/x temps
    )
    vmem_limit = int(min(max(vmem_cap - (16 << 20), 8 << 20),
                         max(2 * footprint, 8 << 20)))

    cost = pl.CostEstimate(
        flops=int(2 * Bp * Np * H * 2 + num_splits * 2 * Bp * H * H * 2),
        transcendentals=0,
        bytes_accessed=int(N * H * (isz_z + isz_x) + Np * 4
                           + 2 * H * H * 4 + H * 4 + num_splits * Bp * H * 4),
    )

    if num_splits > 1:
        dim_sem = (pltpu.CORE_PARALLEL, pltpu.ARBITRARY)   # use both v7x TCs
    else:
        dim_sem = (pltpu.ARBITRARY, pltpu.ARBITRARY)

    kernel = functools.partial(_decoder_kernel, n_nodes=N, tile_n=TN,
                               tiles_per_core=tpc)

    # z/x block indices are clamped to the last real block; fully-padded tiles
    # (only possible when num_splits > 1) are neutralized by the validity mask
    # and by batch id -1.
    def _node_map(c, t):
        return (jnp.minimum(c * tpc + t, last_blk), 0)

    partials = pl.pallas_call(
        kernel,
        out_shape=jax.ShapeDtypeStruct((num_splits, Bp, H), jnp.float32),
        grid_spec=pltpu.PrefetchScalarGridSpec(
            num_scalar_prefetch=0,
            grid=(num_splits, tiles_per_core),
            in_specs=[
                pl.BlockSpec((1, TN), lambda c, t: (0, c * tpc + t)),
                pl.BlockSpec((TN, H), _node_map),
                pl.BlockSpec((TN, H), _node_map),
                pl.BlockSpec((H, H), lambda c, t: (0, 0)),
                pl.BlockSpec((H, H), lambda c, t: (0, 0)),
                pl.BlockSpec((1, H), lambda c, t: (0, 0)),
            ],
            out_specs=pl.BlockSpec((None, Bp, H), lambda c, t: (c, 0, 0)),
            scratch_shapes=[pltpu.VMEM((Bp, H), jnp.float32),
                            pltpu.VMEM((Bp, H), jnp.float32)],
        ),
        compiler_params=pltpu.CompilerParams(
            dimension_semantics=dim_sem,
            vmem_limit_bytes=vmem_limit,
        ),
        cost_estimate=cost,
    )(batch_p, z, x, wz, wx, b_p)

    if num_splits == 1:
        out = partials[0]
    else:
        out = jnp.sum(partials, axis=0)      # combine per-core partial slabs
    return out[:B]


def decoder_reference(x, z, batch, weight, bias, num_graphs):
    onehot = (batch[None, :] == jnp.arange(num_graphs)[:, None])
    z_sum = onehot.astype(z.dtype) @ z
    x_sum = onehot.astype(x.dtype) @ x
    cat = jnp.concatenate([z_sum, x_sum], axis=1)
    return cat @ weight.T + bias


if __name__ == "__main__":
    key = jax.random.PRNGKey(0)
    n_hidden = 32
    N = 8          # total nodes
    B = 2          # graphs in batch

    k_x, k_z, k_w, k_b = jax.random.split(key, 4)
    x = jax.random.normal(k_x, (N, n_hidden), dtype=jnp.float32)
    z = jax.random.normal(k_z, (N, n_hidden), dtype=jnp.float32)
    batch = jnp.array([0, 0, 0, 0, 1, 1, 1, 1], dtype=jnp.int32)

    # Deterministic PyTorch-like Linear init: U(-1/sqrt(fan_in), 1/sqrt(fan_in))
    fan_in = 2 * n_hidden
    bound = 1.0 / jnp.sqrt(jnp.float32(fan_in))
    weight = jax.random.uniform(k_w, (n_hidden, 2 * n_hidden),
                                minval=-bound, maxval=bound, dtype=jnp.float32)
    bias = jax.random.uniform(k_b, (n_hidden,),
                              minval=-bound, maxval=bound, dtype=jnp.float32)

    out = decoder_forward(x, z, batch, weight, bias, num_graphs=B)
    out = jax.block_until_ready(out)

    ref = decoder_reference(x, z, batch, weight, bias, num_graphs=B)
    assert out.shape == (B, n_hidden)
    assert jnp.allclose(out, ref, atol=1e-5, rtol=1e-5)
    print("KERNEL_OK")
</pallas_src>

<mosaic_0001>
module attributes {stable_mosaic.version = 11 : i64} {
  func.func @_decoder_kernel(%arg0: i32, %arg1: i32, %arg2: memref<1x128xi32, #tpu.memory_space<vmem>>, %arg3: memref<128x32xf32, #tpu.memory_space<vmem>>, %arg4: memref<128x32xf32, #tpu.memory_space<vmem>>, %arg5: memref<32x32xf32, #tpu.memory_space<vmem>>, %arg6: memref<32x32xf32, #tpu.memory_space<vmem>>, %arg7: memref<1x32xf32, #tpu.memory_space<vmem>>, %arg8: memref<1x8x32xf32, #tpu.memory_space<vmem>>, %arg9: memref<8x32xf32, #tpu.memory_space<vmem>>, %arg10: memref<8x32xf32, #tpu.memory_space<vmem>>) attributes {dimension_semantics = [#tpu.dimension_semantics<arbitrary>, #tpu.dimension_semantics<arbitrary>], iteration_bounds = array<i64: 1, 1>, scalar_prefetch = 0 : i64, scratch_operands = 2 : i64, tpu.core_type = #tpu.core_type<tc>, window_params = [{transform_indices = @transform_0, window_bounds = array<i64: 1, 128>}, {transform_indices = @transform_1, window_bounds = array<i64: 128, 32>}, {transform_indices = @transform_2, window_bounds = array<i64: 128, 32>}, {pipeline_mode = #tpu.pipeline_mode<synchronous>, transform_indices = @transform_3, window_bounds = array<i64: 32, 32>}, {pipeline_mode = #tpu.pipeline_mode<synchronous>, transform_indices = @transform_4, window_bounds = array<i64: 32, 32>}, {pipeline_mode = #tpu.pipeline_mode<synchronous>, transform_indices = @transform_5, window_bounds = array<i64: 1, 32>}, {transform_indices = @transform_6, window_bounds = array<i64: 1, 8, 32>}]} {
    %c0_i32 = arith.constant 0 : i32
    %0 = arith.cmpi eq, %arg1, %c0_i32 : i32
    %1 = arith.extui %0 : i1 to i32
    %c0_i32_0 = arith.constant 0 : i32
    %2 = arith.cmpi ne, %1, %c0_i32_0 : i32
    scf.if %2 {
      %cst_19 = arith.constant 0.000000e+00 : f32
      %42 = vector.broadcast %cst_19 : f32 to vector<8x32xf32>
      %c0_20 = arith.constant 0 : index
      %c0_21 = arith.constant 0 : index
      %43 = vector.load %arg9[%c0_20, %c0_21] : memref<8x32xf32, #tpu.memory_space<vmem>>, vector<8x32xf32>
      tpu.vector_store %arg9[%c0_20, %c0_21], %42 {strides = array<i32>} : memref<8x32xf32, #tpu.memory_space<vmem>>, vector<8x32xf32>,
      %cst_22 = arith.constant 0.000000e+00 : f32
      %44 = vector.broadcast %cst_22 : f32 to vector<8x32xf32>
      %c0_23 = arith.constant 0 : index
      %c0_24 = arith.constant 0 : index
      %45 = vector.load %arg10[%c0_23, %c0_24] : memref<8x32xf32, #tpu.memory_space<vmem>>, vector<8x32xf32>
      tpu.vector_store %arg10[%c0_23, %c0_24], %44 {strides = array<i32>} : memref<8x32xf32, #tpu.memory_space<vmem>>, vector<8x32xf32>,
    } else {
    }
    %c1_i32 = arith.constant 1 : i32
    %3 = arith.muli %arg0, %c1_i32 : i32
    %4 = arith.addi %3, %arg1 : i32
    %c128_i32 = arith.constant 128 : i32
    %5 = arith.muli %4, %c128_i32 : i32
    %6 = tpu.iota {dimensions = array<i32: 0>} : vector<128x1xi32>
    %7 = vector.broadcast %5 : i32 to vector<128x1xi32>
    %8 = arith.addi %6, %7 : vector<128x1xi32>
    %c8_i32 = arith.constant 8 : i32
    %9 = vector.broadcast %c8_i32 : i32 to vector<128x1xi32>
    %10 = arith.cmpi slt, %8, %9 : vector<128x1xi32>
    %c0 = arith.constant 0 : index
    %c0_1 = arith.constant 0 : index
    %11 = vector.load %arg2[%c0, %c0_1] : memref<1x128xi32, #tpu.memory_space<vmem>>, vector<1x128xi32>
    %12 = tpu.iota {dimensions = array<i32: 0>} : vector<8x128xi32>
    %13 = vector.broadcast %11 : vector<1x128xi32> to vector<8x128xi32>
    %14 = arith.cmpi eq, %12, %13 : vector<8x128xi32>
    %c0_2 = arith.constant 0 : index
    %c0_3 = arith.constant 0 : index
    %15 = vector.load %arg3[%c0_2, %c0_3] : memref<128x32xf32, #tpu.memory_space<vmem>>, vector<128x32xf32>
    %c0_i32_4 = arith.constant 0 : i32
    %16 = arith.sitofp %c0_i32_4 : i32 to f32
    %17 = vector.shape_cast %10 : vector<128x1xi1> to vector<128x1xi1>
    %18 = vector.broadcast %17 : vector<128x1xi1> to vector<128x32xi1>
    %19 = vector.broadcast %16 : f32 to vector<128x32xf32>
    %20 = arith.select %18, %15, %19 : vector<128x32xi1>, vector<128x32xf32>
    %c0_5 = arith.constant 0 : index
    %c0_6 = arith.constant 0 : index
    %21 = vector.load %arg4[%c0_5, %c0_6] : memref<128x32xf32, #tpu.memory_space<vmem>>, vector<128x32xf32>
    %c0_i32_7 = arith.constant 0 : i32
    %22 = arith.sitofp %c0_i32_7 : i32 to f32
    %23 = vector.shape_cast %10 : vector<128x1xi1> to vector<128x1xi1>
    %24 = vector.broadcast %23 : vector<128x1xi1> to vector<128x32xi1>
    %25 = vector.broadcast %22 : f32 to vector<128x32xf32>
    %26 = arith.select %24, %21, %25 : vector<128x32xi1>, vector<128x32xf32>
    %c0_8 = arith.constant 0 : index
    %c0_9 = arith.constant 0 : index
    %27 = vector.load %arg9[%c0_8, %c0_9] : memref<8x32xf32, #tpu.memory_space<vmem>>, vector<8x32xf32>
    %28 = arith.extui %14 : vector<8x128xi1> to vector<8x128xi32>
    %29 = arith.sitofp %28 : vector<8x128xi32> to vector<8x128xf32>
    %cst = arith.constant dense<0.000000e+00> : vector<8x32xf32>
    %30 = tpu.matmul %29, %20, %cst {dimension_numbers = #tpu.dot_dimension_numbers<[1], [0], [0], [1], [0, 0, 1, 1], [], []>} : vector<8x128xf32>, vector<128x32xf32>, vector<8x32xf32> -> vector<8x32xf32>
    %31 = arith.addf %27, %30 : vector<8x32xf32>
    %c0_10 = arith.constant 0 : index
    %c0_11 = arith.constant 0 : index
    %32 = vector.load %arg9[%c0_10, %c0_11] : memref<8x32xf32, #tpu.memory_space<vmem>>, vector<8x32xf32>
    tpu.vector_store %arg9[%c0_10, %c0_11], %31 {strides = array<i32>} : memref<8x32xf32, #tpu.memory_space<vmem>>, vector<8x32xf32>,
    %c0_12 = arith.constant 0 : index
    %c0_13 = arith.constant 0 : index
    %33 = vector.load %arg10[%c0_12, %c0_13] : memref<8x32xf32, #tpu.memory_space<vmem>>, vector<8x32xf32>
    %34 = arith.extui %14 : vector<8x128xi1> to vector<8x128xi32>
    %35 = arith.sitofp %34 : vector<8x128xi32> to vector<8x128xf32>
    %cst_14 = arith.constant dense<0.000000e+00> : vector<8x32xf32>
    %36 = tpu.matmul %35, %26, %cst_14 {dimension_numbers = #tpu.dot_dimension_numbers<[1], [0], [0], [1], [0, 0, 1, 1], [], []>} : vector<8x128xf32>, vector<128x32xf32>, vector<8x32xf32> -> vector<8x32xf32>
    %37 = arith.addf %33, %36 : vector<8x32xf32>
    %c0_15 = arith.constant 0 : index
    %c0_16 = arith.constant 0 : index
    %38 = vector.load %arg10[%c0_15, %c0_16] : memref<8x32xf32, #tpu.memory_space<vmem>>, vector<8x32xf32>
    tpu.vector_store %arg10[%c0_15, %c0_16], %37 {strides = array<i32>} : memref<8x32xf32, #tpu.memory_space<vmem>>, vector<8x32xf32>,
    %c0_i32_17 = arith.constant 0 : i32
    %39 = arith.cmpi eq, %arg1, %c0_i32_17 : i32
    %40 = arith.extui %39 : i1 to i32
    %c0_i32_18 = arith.constant 0 : i32
    %41 = arith.cmpi ne, %40, %c0_i32_18 : i32
    scf.if %41 {
      %c0_19 = arith.constant 0 : index
      %c0_20 = arith.constant 0 : index
      %42 = vector.load %arg9[%c0_19, %c0_20] : memref<8x32xf32, #tpu.memory_space<vmem>>, vector<8x32xf32>
      %c0_21 = arith.constant 0 : index
      %c0_22 = arith.constant 0 : index
      %43 = vector.load %arg5[%c0_21, %c0_22] : memref<32x32xf32, #tpu.memory_space<vmem>>, vector<32x32xf32>
      %cst_23 = arith.constant dense<0.000000e+00> : vector<8x32xf32>
      %44 = tpu.matmul %42, %43, %cst_23 {dimension_numbers = #tpu.dot_dimension_numbers<[1], [0], [0], [1], [0, 0, 1, 1], [], []>} : vector<8x32xf32>, vector<32x32xf32>, vector<8x32xf32> -> vector<8x32xf32>
      %c0_24 = arith.constant 0 : index
      %c0_25 = arith.constant 0 : index
      %45 = vector.load %arg10[%c0_24, %c0_25] : memref<8x32xf32, #tpu.memory_space<vmem>>, vector<8x32xf32>
      %c0_26 = arith.constant 0 : index
      %c0_27 = arith.constant 0 : index
      %46 = vector.load %arg6[%c0_26, %c0_27] : memref<32x32xf32, #tpu.memory_space<vmem>>, vector<32x32xf32>
      %cst_28 = arith.constant dense<0.000000e+00> : vector<8x32xf32>
      %47 = tpu.matmul %45, %46, %cst_28 {dimension_numbers = #tpu.dot_dimension_numbers<[1], [0], [0], [1], [0, 0, 1, 1], [], []>} : vector<8x32xf32>, vector<32x32xf32>, vector<8x32xf32> -> vector<8x32xf32>
      %48 = arith.addf %44, %47 : vector<8x32xf32>
      %c0_i32_29 = arith.constant 0 : i32
      %49 = arith.cmpi eq, %arg0, %c0_i32_29 : i32
      %50 = arith.extui %49 : i1 to i32
      %51 = arith.sitofp %50 : i32 to f32
      %c0_30 = arith.constant 0 : index
      %c0_31 = arith.constant 0 : index
      %52 = vector.load %arg7[%c0_30, %c0_31] : memref<1x32xf32, #tpu.memory_space<vmem>>, vector<1x32xf32>
      %53 = vector.broadcast %51 : f32 to vector<1x32xf32>
      %54 = arith.mulf %53, %52 : vector<1x32xf32>
      %55 = vector.broadcast %54 : vector<1x32xf32> to vector<8x32xf32>
      %56 = arith.addf %48, %55 : vector<8x32xf32>
      %c0_32 = arith.constant 0 : index
      %c0_33 = arith.constant 0 : index
      %c0_34 = arith.constant 0 : index
      %57 = vector.load %arg8[%c0_32, %c0_33, %c0_34] : memref<1x8x32xf32, #tpu.memory_space<vmem>>, vector<1x8x32xf32>
      %58 = vector.shape_cast %57 : vector<1x8x32xf32> to vector<8x32xf32>
      %59 = vector.shape_cast %56 : vector<8x32xf32> to vector<1x8x32xf32>
      tpu.vector_store %arg8[%c0_32, %c0_33, %c0_34], %59 {strides = array<i32>} : memref<1x8x32xf32, #tpu.memory_space<vmem>>, vector<1x8x32xf32>,
    } else {
    }
    return
  }
  func.func @transform_0(%arg0: i32, %arg1: i32) -> (i32, i32) {
    %c1_i32 = arith.constant 1 : i32
    %0 = arith.muli %arg0, %c1_i32 : i32
    %1 = arith.addi %0, %arg1 : i32
    %c0_i32 = arith.constant 0 : i32
    %c0_i32_0 = arith.constant 0 : i32
    return %c0_i32, %1 : i32, i32
  }
  func.func @transform_1(%arg0: i32, %arg1: i32) -> (i32, i32) {
    %c1_i32 = arith.constant 1 : i32
    %0 = arith.muli %arg0, %c1_i32 : i32
    %1 = arith.addi %0, %arg1 : i32
    %c0_i32 = arith.constant 0 : i32
    %2 = arith.minsi %1, %c0_i32 : i32
    %c0_i32_0 = arith.constant 0 : i32
    %c0_i32_1 = arith.constant 0 : i32
    return %2, %c0_i32_0 : i32, i32
  }
  func.func @transform_2(%arg0: i32, %arg1: i32) -> (i32, i32) {
    %c1_i32 = arith.constant 1 : i32
    %0 = arith.muli %arg0, %c1_i32 : i32
    %1 = arith.addi %0, %arg1 : i32
    %c0_i32 = arith.constant 0 : i32
    %2 = arith.minsi %1, %c0_i32 : i32
    %c0_i32_0 = arith.constant 0 : i32
    %c0_i32_1 = arith.constant 0 : i32
    return %2, %c0_i32_0 : i32, i32
  }
  func.func @transform_3(%arg0: i32, %arg1: i32) -> (i32, i32) {
    %c0_i32 = arith.constant 0 : i32
    %c0_i32_0 = arith.constant 0 : i32
    %c0_i32_1 = arith.constant 0 : i32
    return %c0_i32, %c0_i32_0 : i32, i32
  }
  func.func @transform_4(%arg0: i32, %arg1: i32) -> (i32, i32) {
    %c0_i32 = arith.constant 0 : i32
    %c0_i32_0 = arith.constant 0 : i32
    %c0_i32_1 = arith.constant 0 : i32
    return %c0_i32, %c0_i32_0 : i32, i32
  }
  func.func @transform_5(%arg0: i32, %arg1: i32) -> (i32, i32) {
    %c0_i32 = arith.constant 0 : i32
    %c0_i32_0 = arith.constant 0 : i32
    %c0_i32_1 = arith.constant 0 : i32
    return %c0_i32, %c0_i32_0 : i32, i32
  }
  func.func @transform_6(%arg0: i32, %arg1: i32) -> (i32, i32, i32) {
    %c0_i32 = arith.constant 0 : i32
    %c0_i32_0 = arith.constant 0 : i32
    %c0_i32_1 = arith.constant 0 : i32
    return %arg0, %c0_i32, %c0_i32_0 : i32, i32, i32
  }
}

</mosaic_0001>

<llo_original>
// kernel: tpu_custom_call.1
$region0: #{tpu_custom_call.1}
  #allocation0 [shape = 'u32[]', space=smem, size = 0x4, offset = 0x4, fixed_abs, tag = 'smem constant byte address 0x4 - core index']
  #allocation1 [shape = 'u32[144,128]{1,0:T(1,128)}', space=vmem, size = 0x12000, scoped, tag = 'internal scratch']
  #allocation2 [shape = 'f32[8,32]{1,0:T(8,128)}', space=vmem, size = 0x1000, scoped, tag = 'scratch operand']
  #allocation3 [shape = 'f32[8,32]{1,0:T(8,128)}', space=vmem, size = 0x1000, scoped, tag = 'scratch operand']
  %s0 = inlined_call_operand.hbm [shape: s32[1,128], index: 0, kind: input, shape index: {}]
  %s1 = inlined_call_operand.hbm [shape: f32[8,32], index: 1, kind: input, shape index: {}]
  %s2 = inlined_call_operand.hbm [shape: f32[8,32], index: 2, kind: input, shape index: {}]
  %s3 = inlined_call_operand.hbm [shape: f32[32,32], index: 3, kind: input, shape index: {}]
  %s4 = inlined_call_operand.hbm [shape: f32[32,32], index: 4, kind: input, shape index: {}]
  %s5 = inlined_call_operand.vmem [shape: f32[1,32], index: 5, kind: input, shape index: {}]
  %s6 = inlined_call_operand.hbm [shape: f32[1,8,32], index: 6, kind: output, shape index: {}]
  %s7 = sld [smem:[#allocation0]]
  $region62: #{tpu_custom_call.1} parent=0
    _
  %s9 = ssub.s32 1, %s7
  %s10 = scalar_select 0, %s9, %s7
  $region1: #{tpu_custom_call.1} parent=0
    #allocation4 [shape = 'u8[512]{0}', space=vmem, size = 0x400, scoped, tag = 'input window, operand 0, single buffered']
    #allocation5 [shape = 's32[1]{0}', space=sflag, size = 0x4, scoped, tag = 'scoped memory for tpu_custom_call.1']
    #allocation6 [shape = 's32[1]{0}', space=sflag, size = 0x4, scoped, tag = 'scoped memory for tpu_custom_call.1']
    #allocation7 [shape = 'u8[65536]{0}', space=vmem, size = 0x10000, scoped, tag = 'input window, operand 1, single buffered']
    #allocation8 [shape = 's32[1]{0}', space=sflag, size = 0x4, scoped, tag = 'scoped memory for tpu_custom_call.1']
    #allocation9 [shape = 'u8[65536]{0}', space=vmem, size = 0x10000, scoped, tag = 'input window, operand 2, single buffered']
    #allocation10 [shape = 'u8[16384]{0}', space=vmem, size = 0x4000, scoped, tag = 'input window, operand 3, single buffered']
    #allocation11 [shape = 's32[1]{0}', space=sflag, size = 0x4, scoped, tag = 'scoped memory for tpu_custom_call.1']
    #allocation12 [shape = 'u8[16384]{0}', space=vmem, size = 0x4000, scoped, tag = 'input window, operand 4, single buffered']
    #allocation13 [shape = 'u8[4096]{0}', space=vmem, size = 0x1000, scoped, tag = 'output window, operand 0, single buffered']
    %11 = vsyncpa [#allocation5], 0
    %12 = vsyncpa [#allocation8], 0
    %13 = vsyncpa [#allocation11], 0
    %14 = vsyncpa [#allocation6], 0
    // Predicated region
    $region2: #{tpu_custom_call.1} parent=1 // pred_check
      _
    $region3: #{tpu_custom_call.1} parent=1 // pred_check_branch
      %16 = sbr.rel (0) target = $region5
    $region4: #{tpu_custom_call.1} parent=1 // pred_region
      %s17 = sadd.s32 0, 0
      %s19 = ssub.s32 16, 16
      %20 = vsyncadd [#allocation5], %s19
      %s21 = smul.addr %s17, 16
      %s22 = scalar_lea.hbm %s0, %s21
      %s24 = sshll.u32 [#allocation4], 4
      %s25 = int_to_ptr.vmem [resolvable:$true] %s24
      %27 = dma.hbm_to_vmem [thread:$0]  %s22, 16, %s25, [#allocation5]
    $region5: #{tpu_custom_call.1} parent=1 // pred_fallthru
      _
    // Predicated region
    $region6: #{tpu_custom_call.1} parent=1 // pred_check
      _
    $region7: #{tpu_custom_call.1} parent=1 // pred_check_branch
      %29 = sbr.rel (0) target = $region9
    $region8: #{tpu_custom_call.1} parent=1 // pred_region
      %s30 = sadd.s32 0, 0
      %p31 = scmp.lt.s32.totalorder %s30, 0
      %s32 = scalar_select %p31, %s30, 0
      %s33 = smul.u32 16, %s32
      %s34 = ssub.s32 1, %s33
      %s35 = smul.u32 128, %s34
      %s37 = ssub.s32 2048, %s35
      %38 = vsyncadd [#allocation8], %s37
      %p39 = scmp.ne.s32.totalorder 0, %s35
      %s40 = smul.addr %s33, 128
      %s41 = scalar_lea.hbm %s1, %s40
      %s42 = smul.u32 8, %s34
      %s43 = sshll.u32 [#allocation7], 4
      %s44 = int_to_ptr.vmem [resolvable:$true] %s43
      %s45 = sshll.u32 %s42, 4
      %49 = dma.hbm_to_vmem [thread:$0]  (%p39), %s41, %s45, %s44, [#allocation8], 128, 128, 8
    $region9: #{tpu_custom_call.1} parent=1 // pred_fallthru
      _
    // Predicated region
    $region10: #{tpu_custom_call.1} parent=1 // pred_check
      _
    $region11: #{tpu_custom_call.1} parent=1 // pred_check_branch
      %51 = sbr.rel (0) target = $region13
    $region12: #{tpu_custom_call.1} parent=1 // pred_region
      %s52 = sadd.s32 0, 0
      %p53 = scmp.lt.s32.totalorder %s52, 0
      %s54 = scalar_select %p53, %s52, 0
      %s55 = smul.u32 16, %s54
      %s56 = ssub.s32 1, %s55
      %s57 = smul.u32 128, %s56
      %s59 = ssub.s32 2048, %s57
      %60 = vsyncadd [#allocation8], %s59
      %p61 = scmp.ne.s32.totalorder 0, %s57
      %s62 = smul.addr %s55, 128
      %s63 = scalar_lea.hbm %s2, %s62
      %s64 = smul.u32 8, %s56
      %s65 = sshll.u32 [#allocation9], 4
      %s66 = int_to_ptr.vmem [resolvable:$true] %s65
      %s67 = sshll.u32 %s64, 4
      %71 = dma.hbm_to_vmem [thread:$0]  (%p61), %s63, %s67, %s66, [#allocation8], 128, 128, 8
    $region13: #{tpu_custom_call.1} parent=1 // pred_fallthru
      _
    // Predicated region
    $region14: #{tpu_custom_call.1} parent=1 // pred_check
      _
    $region15: #{tpu_custom_call.1} parent=1 // pred_check_branch
      %73 = sbr.rel (0) target = $region17
    $region16: #{tpu_custom_call.1} parent=1 // pred_region
      %s75 = ssub.s32 512, 512
      %76 = vsyncadd [#allocation11], %s75
      %s77 = sshll.u32 [#allocation10], 4
      %s78 = int_to_ptr.vmem [resolvable:$true] %s77
      %83 = dma.hbm_to_vmem [thread:$0]  %s3, 512, %s78, [#allocation11], 128, 128, 8
    $region17: #{tpu_custom_call.1} parent=1 // pred_fallthru
      _
    // Predicated region
    $region18: #{tpu_custom_call.1} parent=1 // pred_check
      _
    $region19: #{tpu_custom_call.1} parent=1 // pred_check_branch
      %85 = sbr.rel (0) target = $region21
    $region20: #{tpu_custom_call.1} parent=1 // pred_region
      %s87 = ssub.s32 512, 512
      %88 = vsyncadd [#allocation11], %s87
      %s89 = sshll.u32 [#allocation12], 4
      %s90 = int_to_ptr.vmem [resolvable:$true] %s89
      %95 = dma.hbm_to_vmem [thread:$0]  %s4, 512, %s90, [#allocation11], 128, 128, 8
    $region21: #{tpu_custom_call.1} parent=1 // pred_fallthru
      _
    // Predicated region
    $region22: #{tpu_custom_call.1} parent=1 // pred_check
      _
    $region23: #{tpu_custom_call.1} parent=1 // pred_check_branch
      %97 = sbr.rel (0) target = $region25
    $region24: #{tpu_custom_call.1} parent=1 // pred_region
      _
    $region25: #{tpu_custom_call.1} parent=1 // pred_fallthru
      _
    // Predicated region
    $region26: #{tpu_custom_call.1} parent=1 // pred_check
      _
    $region27: #{tpu_custom_call.1} parent=1 // pred_check_branch
      %99 = sbr.rel (0) target = $region29
    $region28: #{tpu_custom_call.1} parent=1 // pred_region
      %100 = dma.done [#allocation5], 16
    $region29: #{tpu_custom_call.1} parent=1 // pred_fallthru
      _
    // Predicated region
    $region30: #{tpu_custom_call.1} parent=1 // pred_check
      _
    $region31: #{tpu_custom_call.1} parent=1 // pred_check_branch
      %102 = sbr.rel (0) target = $region33
    $region32: #{tpu_custom_call.1} parent=1 // pred_region
      %103 = dma.done [#allocation8], 2048
    $region33: #{tpu_custom_call.1} parent=1 // pred_fallthru
      _
    // Predicated region
    $region34: #{tpu_custom_call.1} parent=1 // pred_check
      _
    $region35: #{tpu_custom_call.1} parent=1 // pred_check_branch
      %105 = sbr.rel (0) target = $region37
    $region36: #{tpu_custom_call.1} parent=1 // pred_region
      %106 = dma.done [#allocation8], 2048
    $region37: #{tpu_custom_call.1} parent=1 // pred_fallthru
      _
    // Predicated region
    $region38: #{tpu_custom_call.1} parent=1 // pred_check
      _
    $region39: #{tpu_custom_call.1} parent=1 // pred_check_branch
      %108 = sbr.rel (0) target = $region41
    $region40: #{tpu_custom_call.1} parent=1 // pred_region
      %109 = dma.done [#allocation11], 512
    $region41: #{tpu_custom_call.1} parent=1 // pred_fallthru
      _
    // Predicated region
    $region42: #{tpu_custom_call.1} parent=1 // pred_check
      _
    $region43: #{tpu_custom_call.1} parent=1 // pred_check_branch
      %111 = sbr.rel (0) target = $region45
    $region44: #{tpu_custom_call.1} parent=1 // pred_region
      %112 = dma.done [#allocation11], 512
    $region45: #{tpu_custom_call.1} parent=1 // pred_fallthru
      _
    %s113 = sadd.s32 0, 0
    %s114 = sadd.s32 0, 0
    %p115 = scmp.lt.s32.totalorder %s114, 0
    %s116 = scalar_select %p115, %s114, 0
    %s117 = smul.u32 16, %s116
    %s118 = ssub.s32 1, %s117
    %s119 = smul.u32 128, %s118
    %s120 = sadd.s32 0, 0
    %p121 = scmp.lt.s32.totalorder %s120, 0
    %s122 = scalar_select %p121, %s120, 0
    %s123 = smul.u32 16, %s122
    %s124 = ssub.s32 1, %s123
    %s125 = smul.u32 128, %s124
    %p126 = scmp.eq.s32.totalorder 0, 0
    // Predicated region
    $region46: #{tpu_custom_call.1} parent=1 // pred_check
      %p127 = pneg %p126
    $region47: #{tpu_custom_call.1} parent=1 // pred_check_branch
      %129 = sbr.rel (%p127) target = $region49
    $region48: #{tpu_custom_call.1} parent=1 // pred_region
      %vm130 = vcmask 261120
      %131 = vst.msk [vmem:[#allocation2] sm:$0xff] %vm130, 0.0
      %132 = vst.msk [vmem:[#allocation3] sm:$0xff] %vm130, 0.0
    $region49: #{tpu_custom_call.1} parent=1 // pred_fallthru
      _
    %s133 = sadd.s32 0, 0
    %s134 = smul.u32 %s133, 128
    %v135 = vlaneseq
    %v136 = vshrl.u32 %v135, 7
    %v137 = vadd.s32 %v136, 8
    %v138 = vadd.s32 %v136, 16
    %v139 = vadd.s32 %v136, 24
    %v140 = vadd.s32 %v136, 32
    %v141 = vadd.s32 %v136, 40
    %v142 = vadd.s32 %v136, 48
    %v143 = vadd.s32 %v136, 56
    %v144 = vadd.s32 %v136, 64
    %v145 = vadd.s32 %v136, 72
    %v146 = vadd.s32 %v136, 80
    %v147 = vadd.s32 %v136, 88
    %v148 = vadd.s32 %v136, 96
    %v149 = vadd.s32 %v136, 104
    %v150 = vadd.s32 %v136, 112
    %v151 = vadd.s32 %v136, 120
    %v152 = vstv %s134
    %v153 = vadd.s32 %v136, %v152
    %v154 = vadd.s32 %v137, %v152
    %v155 = vadd.s32 %v138, %v152
    %v156 = vadd.s32 %v139, %v152
    %v157 = vadd.s32 %v140, %v152
    %v158 = vadd.s32 %v141, %v152
    %v159 = vadd.s32 %v142, %v152
    %v160 = vadd.s32 %v143, %v152
    %v161 = vadd.s32 %v144, %v152
    %v162 = vadd.s32 %v145, %v152
    %v163 = vadd.s32 %v146, %v152
    %v164 = vadd.s32 %v147, %v152
    %v165 = vadd.s32 %v148, %v152
    %v166 = vadd.s32 %v149, %v152
    %v167 = vadd.s32 %v150, %v152
    %v168 = vadd.s32 %v151, %v152
    %vm169 = vcmp.lt.s32.totalorder %v153, 8
    %vm170 = vcmp.lt.s32.totalorder %v154, 8
    %vm171 = vcmp.lt.s32.totalorder %v155, 8
    %vm172 = vcmp.lt.s32.totalorder %v156, 8
    %vm173 = vcmp.lt.s32.totalorder %v157, 8
    %vm174 = vcmp.lt.s32.totalorder %v158, 8
    %vm175 = vcmp.lt.s32.totalorder %v159, 8
    %vm176 = vcmp.lt.s32.totalorder %v160, 8
    %vm177 = vcmp.lt.s32.totalorder %v161, 8
    %vm178 = vcmp.lt.s32.totalorder %v162, 8
    %vm179 = vcmp.lt.s32.totalorder %v163, 8
    %vm180 = vcmp.lt.s32.totalorder %v164, 8
    %vm181 = vcmp.lt.s32.totalorder %v165, 8
    %vm182 = vcmp.lt.s32.totalorder %v166, 8
    %vm183 = vcmp.lt.s32.totalorder %v167, 8
    %vm184 = vcmp.lt.s32.totalorder %v168, 8
    %v185 = vld [vmem:[#allocation4] sm:$0x1]
    %v186 = vlaneseq
    %v187 = vshrl.u32 %v186, 7
    %v188 = vsub.s32 0, %v187
    %v189 = vrot.slane %v185, %v188
    %vm190 = vcmp.eq.s32.totalorder %v136, %v189
    %v191 = vld [vmem:[#allocation7] sm:$0xff]
    %v192 = vld [vmem:[#allocation7 + $0x8] sm:$0xff]
    %v193 = vld [vmem:[#allocation7 + $0x10] sm:$0xff]
    %v194 = vld [vmem:[#allocation7 + $0x18] sm:$0xff]
    %v195 = vld [vmem:[#allocation7 + $0x20] sm:$0xff]
    %v196 = vld [vmem:[#allocation7 + $0x28] sm:$0xff]
    %v197 = vld [vmem:[#allocation7 + $0x30] sm:$0xff]
    %v198 = vld [vmem:[#allocation7 + $0x38] sm:$0xff]
    %v199 = vld [vmem:[#allocation7 + $0x40] sm:$0xff]
    %v200 = vld [vmem:[#allocation7 + $0x48] sm:$0xff]
    %v201 = vld [vmem:[#allocation7 + $0x50] sm:$0xff]
    %v202 = vld [vmem:[#allocation7 + $0x58] sm:$0xff]
    %v203 = vld [vmem:[#allocation7 + $0x60] sm:$0xff]
    %v204 = vld [vmem:[#allocation7 + $0x68] sm:$0xff]
    %v205 = vld [vmem:[#allocation7 + $0x70] sm:$0xff]
    %v206 = vld [vmem:[#allocation7 + $0x78] sm:$0xff]
    %v207 = vsel %vm169, 1, 0
    %v208 = vsel %vm170, 1, 0
    %v209 = vsel %vm171, 1, 0
    %v210 = vsel %vm172, 1, 0
    %v211 = vsel %vm173, 1, 0
    %v212 = vsel %vm174, 1, 0
    %v213 = vsel %vm175, 1, 0
    %v214 = vsel %vm176, 1, 0
    %v215 = vsel %vm177, 1, 0
    %v216 = vsel %vm178, 1, 0
    %v217 = vsel %vm179, 1, 0
    %v218 = vsel %vm180, 1, 0
    %v219 = vsel %vm181, 1, 0
    %v220 = vsel %vm182, 1, 0
    %v221 = vsel %vm183, 1, 0
    %v222 = vsel %vm184, 1, 0
    %vm223 = vcmp.eq.s32.totalorder %v207, 1
    %vm224 = vcmp.eq.s32.totalorder %v208, 1
    %vm225 = vcmp.eq.s32.totalorder %v209, 1
    %vm226 = vcmp.eq.s32.totalorder %v210, 1
    %vm227 = vcmp.eq.s32.totalorder %v211, 1
    %vm228 = vcmp.eq.s32.totalorder %v212, 1
    %vm229 = vcmp.eq.s32.totalorder %v213, 1
    %vm230 = vcmp.eq.s32.totalorder %v214, 1
    %vm231 = vcmp.eq.s32.totalorder %v215, 1
    %vm232 = vcmp.eq.s32.totalorder %v216, 1
    %vm233 = vcmp.eq.s32.totalorder %v217, 1
    %vm234 = vcmp.eq.s32.totalorder %v218, 1
    %vm235 = vcmp.eq.s32.totalorder %v219, 1
    %vm236 = vcmp.eq.s32.totalorder %v220, 1
    %vm237 = vcmp.eq.s32.totalorder %v221, 1
    %vm238 = vcmp.eq.s32.totalorder %v222, 1
    %v239 = vsel %vm223, %v191, 0.0
    %v240 = vsel %vm224, %v192, 0.0
    %v241 = vsel %vm225, %v193, 0.0
    %v242 = vsel %vm226, %v194, 0.0
    %v243 = vsel %vm227, %v195, 0.0
    %v244 = vsel %vm228, %v196, 0.0
    %v245 = vsel %vm229, %v197, 0.0
    %v246 = vsel %vm230, %v198, 0.0
    %v247 = vsel %vm231, %v199, 0.0
    %v248 = vsel %vm232, %v200, 0.0
    %v249 = vsel %vm233, %v201, 0.0
    %v250 = vsel %vm234, %v202, 0.0
    %v251 = vsel %vm235, %v203, 0.0
    %v252 = vsel %vm236, %v204, 0.0
    %v253 = vsel %vm237, %v205, 0.0
    %v254 = vsel %vm238, %v206, 0.0
    %v255 = vld [vmem:[#allocation9] sm:$0xff]
    %v256 = vld [vmem:[#allocation9 + $0x8] sm:$0xff]
    %v257 = vld [vmem:[#allocation9 + $0x10] sm:$0xff]
    %v258 = vld [vmem:[#allocation9 + $0x18] sm:$0xff]
    %v259 = vld [vmem:[#allocation9 + $0x20] sm:$0xff]
    %v260 = vld [vmem:[#allocation9 + $0x28] sm:$0xff]
    %v261 = vld [vmem:[#allocation9 + $0x30] sm:$0xff]
    %v262 = vld [vmem:[#allocation9 + $0x38] sm:$0xff]
    %v263 = vld [vmem:[#allocation9 + $0x40] sm:$0xff]
    %v264 = vld [vmem:[#allocation9 + $0x48] sm:$0xff]
    %v265 = vld [vmem:[#allocation9 + $0x50] sm:$0xff]
    %v266 = vld [vmem:[#allocation9 + $0x58] sm:$0xff]
    %v267 = vld [vmem:[#allocation9 + $0x60] sm:$0xff]
    %v268 = vld [vmem:[#allocation9 + $0x68] sm:$0xff]
    %v269 = vld [vmem:[#allocation9 + $0x70] sm:$0xff]
    %v270 = vld [vmem:[#allocation9 + $0x78] sm:$0xff]
    %v271 = vsel %vm223, %v255, 0.0
    %v272 = vsel %vm224, %v256, 0.0
    %v273 = vsel %vm225, %v257, 0.0
    %v274 = vsel %vm226, %v258, 0.0
    %v275 = vsel %vm227, %v259, 0.0
    %v276 = vsel %vm228, %v260, 0.0
    %v277 = vsel %vm229, %v261, 0.0
    %v278 = vsel %vm230, %v262, 0.0
    %v279 = vsel %vm231, %v263, 0.0
    %v280 = vsel %vm232, %v264, 0.0
    %v281 = vsel %vm233, %v265, 0.0
    %v282 = vsel %vm234, %v266, 0.0
    %v283 = vsel %vm235, %v267, 0.0
    %v284 = vsel %vm236, %v268, 0.0
    %v285 = vsel %vm237, %v269, 0.0
    %v286 = vsel %vm238, %v270, 0.0
    %v287 = vld [vmem:[#allocation2] sm:$0xff]
    %v288 = vsel %vm190, 1, 0
    %v289 = vcvt.s32.f32 %v288
    %290 = vmatprep.subr.mxu0 0.0
    %291 = vmatpush1.msra.mxu0 %v254
    %292 = vmatprep.subr.mxu0 0.0
    %293 = vmatpush1.msra.mxu0 %v253
    %294 = vmatprep.subr.mxu0 0.0
    %295 = vmatpush1.msra.mxu0 %v252
    %296 = vmatprep.subr.mxu0 0.0
    %297 = vmatpush1.msra.mxu0 %v251
    %298 = vmatprep.subr.mxu0 0.0
    %299 = vmatpush1.msra.mxu0 %v250
    %300 = vmatprep.subr.mxu0 0.0
    %301 = vmatpush1.msra.mxu0 %v249
    %302 = vmatprep.subr.mxu0 0.0
    %303 = vmatpush1.msra.mxu0 %v248
    %304 = vmatprep.subr.mxu0 0.0
    %305 = vmatpush1.msra.mxu0 %v247
    %306 = vmatprep.subr.mxu0 0.0
    %307 = vmatpush1.msra.mxu0 %v246
    %308 = vmatprep.subr.mxu0 0.0
    %309 = vmatpush1.msra.mxu0 %v245
    %310 = vmatprep.subr.mxu0 0.0
    %311 = vmatpush1.msra.mxu0 %v244
    %312 = vmatprep.subr.mxu0 0.0
    %313 = vmatpush1.msra.mxu0 %v243
    %314 = vmatprep.subr.mxu0 0.0
    %315 = vmatpush1.msra.mxu0 %v242
    %316 = vmatprep.subr.mxu0 0.0
    %317 = vmatpush1.msra.mxu0 %v241
    %318 = vmatprep.subr.mxu0 0.0
    %319 = vmatpush1.msra.mxu0 %v240
    %320 = vmatprep.subr.mxu0 0.0
    %321 = vmatpush1.msra.mxu0 %v239
    %322 = vmatprep.subr.mxu0 0.0
    %323 = vmatpush2.msra.mxu0 0.0
    %324 = vmatprep.subr.mxu0 0.0
    %325 = vmatpush2.msra.mxu0 0.0
    %326 = vmatprep.subr.mxu0 0.0
    %327 = vmatpush2.msra.mxu0 0.0
    %328 = vmatprep.subr.mxu0 0.0
    %329 = vmatpush2.msra.mxu0 0.0
    %330 = vmatprep.subr.mxu0 0.0
    %331 = vmatpush2.msra.mxu0 0.0
    %332 = vmatprep.subr.mxu0 0.0
    %333 = vmatpush2.msra.mxu0 0.0
    %334 = vmatprep.subr.mxu0 0.0
    %335 = vmatpush2.msra.mxu0 0.0
    %336 = vmatprep.subr.mxu0 0.0
    %337 = vmatpush2.msra.mxu0 0.0
    %338 = vmatprep.subr.mxu0 0.0
    %339 = vmatpush2.msra.mxu0 0.0
    %340 = vmatprep.subr.mxu0 0.0
    %341 = vmatpush2.msra.mxu0 0.0
    %342 = vmatprep.subr.mxu0 0.0
    %343 = vmatpush2.msra.mxu0 0.0
    %344 = vmatprep.subr.mxu0 0.0
    %345 = vmatpush2.msra.mxu0 0.0
    %346 = vmatprep.subr.mxu0 0.0
    %347 = vmatpush2.msra.mxu0 0.0
    %348 = vmatprep.subr.mxu0 0.0
    %349 = vmatpush2.msra.mxu0 0.0
    %350 = vmatprep.subr.mxu0 0.0
    %351 = vmatpush2.msra.mxu0 0.0
    %352 = vmatprep.subr.mxu0 0.0
    %353 = vmatpush2.msra.mxu0 0.0
    %354 = vmatprep.mubr.f32.mxu0 0.0
    %355 = vmatmul.mubr.f32.gmra.mxu0 %v289
    %v356 = vpop.f32.mrf.mxu0
    %v357 = vadd.f32 0.0, %v356
    %v358 = vpop.f32.mrf.mxu0
    %359 = vdwg.mxu0
    %v360 = vadd.f32 %v287, %v357
    %vm361 = vcmask 261120
    %362 = vst.msk [vmem:[#allocation2] sm:$0xff] %vm361, %v360
    %v363 = vld [vmem:[#allocation3] sm:$0xff]
    %364 = vmatprep.subr.mxu0 0.0
    %365 = vmatpush1.msra.mxu0 %v286
    %366 = vmatprep.subr.mxu0 0.0
    %367 = vmatpush1.msra.mxu0 %v285
    %368 = vmatprep.subr.mxu0 0.0
    %369 = vmatpush1.msra.mxu0 %v284
    %370 = vmatprep.subr.mxu0 0.0
    %371 = vmatpush1.msra.mxu0 %v283
    %372 = vmatprep.subr.mxu0 0.0
    %373 = vmatpush1.msra.mxu0 %v282
    %374 = vmatprep.subr.mxu0 0.0
    %375 = vmatpush1.msra.mxu0 %v281
    %376 = vmatprep.subr.mxu0 0.0
    %377 = vmatpush1.msra.mxu0 %v280
    %378 = vmatprep.subr.mxu0 0.0
    %379 = vmatpush1.msra.mxu0 %v279
    %380 = vmatprep.subr.mxu0 0.0
    %381 = vmatpush1.msra.mxu0 %v278
    %382 = vmatprep.subr.mxu0 0.0
    %383 = vmatpush1.msra.mxu0 %v277
    %384 = vmatprep.subr.mxu0 0.0
    %385 = vmatpush1.msra.mxu0 %v276
    %386 = vmatprep.subr.mxu0 0.0
    %387 = vmatpush1.msra.mxu0 %v275
    %388 = vmatprep.subr.mxu0 0.0
    %389 = vmatpush1.msra.mxu0 %v274
    %390 = vmatprep.subr.mxu0 0.0
    %391 = vmatpush1.msra.mxu0 %v273
    %392 = vmatprep.subr.mxu0 0.0
    %393 = vmatpush1.msra.mxu0 %v272
    %394 = vmatprep.subr.mxu0 0.0
    %395 = vmatpush1.msra.mxu0 %v271
    %396 = vmatprep.subr.mxu0 0.0
    %397 = vmatpush2.msra.mxu0 0.0
    %398 = vmatprep.subr.mxu0 0.0
    %399 = vmatpush2.msra.mxu0 0.0
    %400 = vmatprep.subr.mxu0 0.0
    %401 = vmatpush2.msra.mxu0 0.0
    %402 = vmatprep.subr.mxu0 0.0
    %403 = vmatpush2.msra.mxu0 0.0
    %404 = vmatprep.subr.mxu0 0.0
    %405 = vmatpush2.msra.mxu0 0.0
    %406 = vmatprep.subr.mxu0 0.0
    %407 = vmatpush2.msra.mxu0 0.0
    %408 = vmatprep.subr.mxu0 0.0
    %409 = vmatpush2.msra.mxu0 0.0
    %410 = vmatprep.subr.mxu0 0.0
    %411 = vmatpush2.msra.mxu0 0.0
    %412 = vmatprep.subr.mxu0 0.0
    %413 = vmatpush2.msra.mxu0 0.0
    %414 = vmatprep.subr.mxu0 0.0
    %415 = vmatpush2.msra.mxu0 0.0
    %416 = vmatprep.subr.mxu0 0.0
    %417 = vmatpush2.msra.mxu0 0.0
    %418 = vmatprep.subr.mxu0 0.0
    %419 = vmatpush2.msra.mxu0 0.0
    %420 = vmatprep.subr.mxu0 0.0
    %421 = vmatpush2.msra.mxu0 0.0
    %422 = vmatprep.subr.mxu0 0.0
    %423 = vmatpush2.msra.mxu0 0.0
    %424 = vmatprep.subr.mxu0 0.0
    %425 = vmatpush2.msra.mxu0 0.0
    %426 = vmatprep.subr.mxu0 0.0
    %427 = vmatpush2.msra.mxu0 0.0
    %428 = vmatprep.mubr.f32.mxu0 0.0
    %429 = vmatmul.mubr.f32.gmra.mxu0 %v289
    %v430 = vpop.f32.mrf.mxu0
    %v431 = vadd.f32 0.0, %v430
    %v432 = vpop.f32.mrf.mxu0
    %433 = vdwg.mxu0
    %v434 = vadd.f32 %v363, %v431
    %435 = vst.msk [vmem:[#allocation3] sm:$0xff] %vm361, %v434
    // Predicated region
    $region50: #{tpu_custom_call.1} parent=1 // pred_check
      %p436 = pneg %p126
    $region51: #{tpu_custom_call.1} parent=1 // pred_check_branch
      %438 = sbr.rel (%p436) target = $region53
    $region52: #{tpu_custom_call.1} parent=1 // pred_region
      %v439 = vld [vmem:[#allocation2] sm:$0xff]
      %v440 = vld [vmem:[#allocation10] sm:$0xff]
      %v441 = vld [vmem:[#allocation10 + $0x8] sm:$0xff]
      %v442 = vld [vmem:[#allocation10 + $0x10] sm:$0xff]
      %v443 = vld [vmem:[#allocation10 + $0x18] sm:$0xff]
      %v444 = vld [vmem:[#allocation3] sm:$0xff]
      %v445 = vld [vmem:[#allocation12] sm:$0xff]
      %v446 = vld [vmem:[#allocation12 + $0x8] sm:$0xff]
      %v447 = vld [vmem:[#allocation12 + $0x10] sm:$0xff]
      %v448 = vld [vmem:[#allocation12 + $0x18] sm:$0xff]
      %v450 = vsel %vm361, %v444, 0
      %452 = vmatprep.subr.mxu0 0.0
      %453 = vmatpush1.msra.mxu0 0.0
      %454 = vmatprep.subr.mxu0 0.0
      %455 = vmatpush1.msra.mxu0 0.0
      %456 = vmatprep.subr.mxu0 0.0
      %457 = vmatpush1.msra.mxu0 0.0
      %458 = vmatprep.subr.mxu0 0.0
      %459 = vmatpush1.msra.mxu0 0.0
      %460 = vmatprep.subr.mxu0 0.0
      %461 = vmatpush1.msra.mxu0 0.0
      %462 = vmatprep.subr.mxu0 0.0
      %463 = vmatpush1.msra.mxu0 0.0
      %464 = vmatprep.subr.mxu0 0.0
      %465 = vmatpush1.msra.mxu0 0.0
      %466 = vmatprep.subr.mxu0 0.0
      %467 = vmatpush1.msra.mxu0 0.0
      %468 = vmatprep.subr.mxu0 0.0
      %469 = vmatpush1.msra.mxu0 0.0
      %470 = vmatprep.subr.mxu0 0.0
      %471 = vmatpush1.msra.mxu0 0.0
      %472 = vmatprep.subr.mxu0 0.0
      %473 = vmatpush1.msra.mxu0 0.0
      %474 = vmatprep.subr.mxu0 0.0
      %475 = vmatpush1.msra.mxu0 0.0
      %476 = vmatprep.subr.mxu0 0.0
      %477 = vmatpush1.msra.mxu0 %v448
      %478 = vmatprep.subr.mxu0 0.0
      %479 = vmatpush1.msra.mxu0 %v447
      %480 = vmatprep.subr.mxu0 0.0
      %481 = vmatpush1.msra.mxu0 %v446
      %482 = vmatprep.subr.mxu0 0.0
      %483 = vmatpush1.msra.mxu0 %v445
      %484 = vmatprep.subr.mxu0 0.0
      %485 = vmatpush2.msra.mxu0 0.0
      %486 = vmatprep.subr.mxu0 0.0
      %487 = vmatpush2.msra.mxu0 0.0
      %488 = vmatprep.subr.mxu0 0.0
      %489 = vmatpush2.msra.mxu0 0.0
      %490 = vmatprep.subr.mxu0 0.0
      %491 = vmatpush2.msra.mxu0 0.0
      %492 = vmatprep.subr.mxu0 0.0
      %493 = vmatpush2.msra.mxu0 0.0
      %494 = vmatprep.subr.mxu0 0.0
      %495 = vmatpush2.msra.mxu0 0.0
      %496 = vmatprep.subr.mxu0 0.0
      %497 = vmatpush2.msra.mxu0 0.0
      %498 = vmatprep.subr.mxu0 0.0
      %499 = vmatpush2.msra.mxu0 0.0
      %500 = vmatprep.subr.mxu0 0.0
      %501 = vmatpush2.msra.mxu0 0.0
      %502 = vmatprep.subr.mxu0 0.0
      %503 = vmatpush2.msra.mxu0 0.0
      %504 = vmatprep.subr.mxu0 0.0
      %505 = vmatpush2.msra.mxu0 0.0
      %506 = vmatprep.subr.mxu0 0.0
      %507 = vmatpush2.msra.mxu0 0.0
      %508 = vmatprep.subr.mxu0 0.0
      %509 = vmatpush2.msra.mxu0 0.0
      %510 = vmatprep.subr.mxu0 0.0
      %511 = vmatpush2.msra.mxu0 0.0
      %512 = vmatprep.subr.mxu0 0.0
      %513 = vmatpush2.msra.mxu0 0.0
      %514 = vmatprep.subr.mxu0 0.0
      %515 = vmatpush2.msra.mxu0 0.0
      %516 = vmatprep.mubr.f32.mxu0 0.0
      %517 = vmatmul.mubr.f32.gmra.mxu0 %v450
      %v518 = vpop.f32.mrf.mxu0
      %v519 = vadd.f32 0.0, %v518
      %v520 = vpop.f32.mrf.mxu0
      %521 = vdwg.mxu0
      %v523 = vsel %vm361, %v439, 0
      %525 = vmatprep.subr.mxu0 0.0
      %526 = vmatpush1.msra.mxu0 0.0
      %527 = vmatprep.subr.mxu0 0.0
      %528 = vmatpush1.msra.mxu0 0.0
      %529 = vmatprep.subr.mxu0 0.0
      %530 = vmatpush1.msra.mxu0 0.0
      %531 = vmatprep.subr.mxu0 0.0
      %532 = vmatpush1.msra.mxu0 0.0
      %533 = vmatprep.subr.mxu0 0.0
      %534 = vmatpush1.msra.mxu0 0.0
      %535 = vmatprep.subr.mxu0 0.0
      %536 = vmatpush1.msra.mxu0 0.0
      %537 = vmatprep.subr.mxu0 0.0
      %538 = vmatpush1.msra.mxu0 0.0
      %539 = vmatprep.subr.mxu0 0.0
      %540 = vmatpush1.msra.mxu0 0.0
      %541 = vmatprep.subr.mxu0 0.0
      %542 = vmatpush1.msra.mxu0 0.0
      %543 = vmatprep.subr.mxu0 0.0
      %544 = vmatpush1.msra.mxu0 0.0
      %545 = vmatprep.subr.mxu0 0.0
      %546 = vmatpush1.msra.mxu0 0.0
      %547 = vmatprep.subr.mxu0 0.0
      %548 = vmatpush1.msra.mxu0 0.0
      %549 = vmatprep.subr.mxu0 0.0
      %550 = vmatpush1.msra.mxu0 %v443
      %551 = vmatprep.subr.mxu0 0.0
      %552 = vmatpush1.msra.mxu0 %v442
      %553 = vmatprep.subr.mxu0 0.0
      %554 = vmatpush1.msra.mxu0 %v441
      %555 = vmatprep.subr.mxu0 0.0
      %556 = vmatpush1.msra.mxu0 %v440
      %557 = vmatprep.subr.mxu0 0.0
      %558 = vmatpush2.msra.mxu0 0.0
      %559 = vmatprep.subr.mxu0 0.0
      %560 = vmatpush2.msra.mxu0 0.0
      %561 = vmatprep.subr.mxu0 0.0
      %562 = vmatpush2.msra.mxu0 0.0
      %563 = vmatprep.subr.mxu0 0.0
      %564 = vmatpush2.msra.mxu0 0.0
      %565 = vmatprep.subr.mxu0 0.0
      %566 = vmatpush2.msra.mxu0 0.0
      %567 = vmatprep.subr.mxu0 0.0
      %568 = vmatpush2.msra.mxu0 0.0
      %569 = vmatprep.subr.mxu0 0.0
      %570 = vmatpush2.msra.mxu0 0.0
      %571 = vmatprep.subr.mxu0 0.0
      %572 = vmatpush2.msra.mxu0 0.0
      %573 = vmatprep.subr.mxu0 0.0
      %574 = vmatpush2.msra.mxu0 0.0
      %575 = vmatprep.subr.mxu0 0.0
      %576 = vmatpush2.msra.mxu0 0.0
      %577 = vmatprep.subr.mxu0 0.0
      %578 = vmatpush2.msra.mxu0 0.0
      %579 = vmatprep.subr.mxu0 0.0
      %580 = vmatpush2.msra.mxu0 0.0
      %581 = vmatprep.subr.mxu0 0.0
      %582 = vmatpush2.msra.mxu0 0.0
      %583 = vmatprep.subr.mxu0 0.0
      %584 = vmatpush2.msra.mxu0 0.0
      %585 = vmatprep.subr.mxu0 0.0
      %586 = vmatpush2.msra.mxu0 0.0
      %587 = vmatprep.subr.mxu0 0.0
      %588 = vmatpush2.msra.mxu0 0.0
      %589 = vmatprep.mubr.f32.mxu0 0.0
      %590 = vmatmul.mubr.f32.gmra.mxu0 %v523
      %v591 = vpop.f32.mrf.mxu0
      %v592 = vadd.f32 %v519, %v591
      %v593 = vpop.f32.mrf.mxu0
      %594 = vdwg.mxu0
      %p595 = scmp.eq.s32.totalorder 0, 0
      %s596 = scalar_select %p595, 1, 0
      %s597 = scvt.s32.f32 %s596
      %v598 = vld [vmem:[%s5] sm:$0x1]
      %v599 = vstv %s597
      %v600 = vmul.f32 %v599, %v598
      %v602 = vlaneseq
      %v603 = vshrl.u32 %v602, 7
      %v604 = vsub.s32 0, %v603
      %v605 = vrot.slane %v600, %v604
      %v607 = vadd.f32 %v592, %v605
      %608 = vst.msk [vmem:[#allocation13] sm:$0xff] %vm361, %v607
    $region53: #{tpu_custom_call.1} parent=1 // pred_fallthru
      _
    // Predicated region
    $region54: #{tpu_custom_call.1} parent=1 // pred_check
      _
    $region55: #{tpu_custom_call.1} parent=1 // pred_check_branch
      %610 = sbr.rel (0) target = $region57
    $region56: #{tpu_custom_call.1} parent=1 // pred_region
      %s612 = ssub.s32 128, 128
      %613 = vsyncadd [#allocation6], %s612
      %s615 = sshll.u32 [#allocation13], 4
      %s616 = int_to_ptr.vmem [resolvable:$true] %s615
      %618 = dma.vmem_to_hbm [thread:$0]  %s616, 128, %s6, [#allocation6]
    $region57: #{tpu_custom_call.1} parent=1 // pred_fallthru
      _
    // Predicated region
    $region58: #{tpu_custom_call.1} parent=1 // pred_check
      _
    $region59: #{tpu_custom_call.1} parent=1 // pred_check_branch
      %620 = sbr.rel (0) target = $region61
    $region60: #{tpu_custom_call.1} parent=1 // pred_region
      %621 = dma.done [#allocation6], 128
    $region61: #{tpu_custom_call.1} parent=1 // pred_fallthru
      _
    %622 = vsyncpa [#allocation5], 1
    %623 = vsyncpa [#allocation8], 1
    %624 = vsyncpa [#allocation11], 1
    %625 = vsyncpa [#allocation6], 1

</llo_original>
